<compile_context>
chip_gen: v6e
topology: v6e:2x2x1
jax: 0.10.0
libtpu: 0.0.40
codegen_flags: <defaults>
</compile_context>

<pallas_src>
import jax
import jax.numpy as jnp
import numpy as np
from jax import lax
from jax.experimental import pallas as pl
from jax.experimental.pallas import tpu as pltpu


# --------------------------------------------------------------------------
# Kernel 1: ScalarMix over BERT layers.
# --------------------------------------------------------------------------
def _scalar_mix_kernel(w_ref, layers_ref, mixed_ref):
    """One (sentence b, source tile s) grid step.

    w_ref:      SMEM (L,) f32       softmax(scalar_mix) * gamma, precomputed
    layers_ref: VMEM (L, 1, TS, H)  BERT layer activations for this tile
    mixed_ref:  VMEM (1, TS, H)     output: ScalarMix result (out_dtype)
    """
    L = layers_ref.shape[0]
    # L is small & static -> unrolled VPU mul-adds, f32 accumulation.  The
    # kernel is bound by the L-layer HBM reads, so any accumulator spill to
    # VMEM hides under the DMA.
    acc = w_ref[0] * layers_ref[0, 0].astype(jnp.float32)
    for l in range(1, L):
        acc = acc + w_ref[l] * layers_ref[l, 0].astype(jnp.float32)
    mixed_ref[0] = acc.astype(mixed_ref.dtype)


# --------------------------------------------------------------------------
# Kernel 2: posteriorIndictedEmb broadcast (the dominant HBM write stream).
# --------------------------------------------------------------------------
def _broadcast_kernel(mixed_ref, emb_ref):
    """One (sentence b, AMR-node tile) grid step.

    mixed_ref: VMEM (1, S, H)      ScalarMix embedding of sentence b
                                   (index_map constant over a -> DMA'd once per b)
    emb_ref:   VMEM (1, TA, S, H)  output: embedding broadcast over AMR nodes
    """
    ta = emb_ref.shape[1]

    def body(i, carry):
        # Load inside the per-row body: bounds the live range to one (S, H)
        # row so vld/vst pipeline cleanly against the output writeback DMA.
        emb_ref[0, i] = mixed_ref[0]
        return carry

    lax.fori_loop(0, ta, body, 0, unroll=True)


# --------------------------------------------------------------------------
# Wrapper.
# --------------------------------------------------------------------------
def _pick_tile(total, bytes_per_unit, budget_bytes, align=1):
    """Largest divisor t of `total` (t % align == 0 unless t == total) whose
    block (t * bytes_per_unit) fits the budget; falls back to smallest legal."""
    candidates = [t for t in range(1, total + 1)
                  if total % t == 0 and (t % align == 0 or t == total)]
    fitting = [t for t in candidates if t * bytes_per_unit <= budget_bytes]
    return max(fitting) if fitting else min(candidates)


def rel_bert_sentence_encoder(layer_embs, posterior, mix_scalars, gamma,
                              *, out_dtype=jnp.bfloat16,
                              amr_tile=None, src_tile=None):
    """layer_embs : [L, B, S, H]  BERT per-layer activations (f32 or bf16)
       posterior  : [B, A, S]     AMR-node -> source-token alignment distributions
       mix_scalars: [L], gamma: scalar (ScalarMix parameters)

    Returns (emb [B, A, S, H], indicator [B, A, S]) in `out_dtype` (bf16 by
    default: the forward is HBM-store-bound on the A-fold broadcast, so
    halving output bytes is ~2x; ScalarMix still accumulates in f32).
    Concatenating the indicator as channel H reproduces the module's
    [*, H+1] relation-source encoding; keeping it separate avoids the
    lane-hostile H+1 last dim, and since it is a copy of `posterior` it never
    goes through a kernel.  For lane-dense stores H should be a multiple of
    128 -- true for real BERT hidden sizes (768 / 1024)."""
    L, B, S, H = layer_embs.shape
    Bp, A, Sp = posterior.shape
    assert (Bp, Sp) == (B, S)
    out_dtype = jnp.dtype(out_dtype)
    in_dtype = layer_embs.dtype

    # Glue: ScalarMix weight normalization (tiny scalar softmax).
    w = (jax.nn.softmax(mix_scalars.astype(jnp.float32)) * gamma).astype(jnp.float32)

    # ---- Kernel 1: ScalarMix -> mixed [B, S, H] (out_dtype) ----
    # S is tiled so the (L, 1, TS, H) layers block stays a few MiB even for
    # BERT-base/large, keeping double-buffered VMEM inside v7x's 64 MiB
    # physical and v5e's scoped limit.
    ts = src_tile or _pick_tile(S, L * H * in_dtype.itemsize,
                                budget_bytes=6 * 2**20, align=8)
    assert S % ts == 0 and (ts == S or ts % 8 == 0)
    mix_vmem = 2 * (L * ts * H * in_dtype.itemsize + ts * H * out_dtype.itemsize)

    mixed = pl.pallas_call(
        _scalar_mix_kernel,
        out_shape=jax.ShapeDtypeStruct((B, S, H), out_dtype),
        grid=(B, S // ts),
        in_specs=[
            pl.BlockSpec(memory_space=pltpu.MemorySpace.SMEM),        # mix weights
            pl.BlockSpec((L, 1, ts, H), lambda b, s: (0, b, s, 0)),   # layer tile
        ],
        out_specs=pl.BlockSpec((1, ts, H), lambda b, s: (b, s, 0)),
        compiler_params=pltpu.CompilerParams(
            # The L reduction is inside the step -> both axes independent
            # (megacore shards them on v7x).
            dimension_semantics=("parallel", "parallel"),
            vmem_limit_bytes=int(max(mix_vmem + 4 * 2**20, 32 * 2**20)),
        ),
        cost_estimate=pl.CostEstimate(
            flops=2 * L * B * S * H,
            transcendentals=0,
            bytes_accessed=L * B * S * H * in_dtype.itemsize
                           + B * S * H * out_dtype.itemsize),
    )(w, layer_embs)

    # ---- Kernel 2: A-fold broadcast -> emb [B, A, S, H] ----
    # `mixed` has no per-a dependence: its index_map is constant over the AMR
    # axis (DMA'd once per sentence) and both grid axes are parallel.  TA is
    # sized so the output block per step is MiB-scale (HBM-roofline territory)
    # while the double-buffered blocks stay small in VMEM.
    ta = amr_tile or _pick_tile(A, S * H * out_dtype.itemsize,
                                budget_bytes=4 * 2**20, align=1)
    assert A % ta == 0
    bc_vmem = 2 * (S * H * out_dtype.itemsize + ta * S * H * out_dtype.itemsize)

    emb = pl.pallas_call(
        _broadcast_kernel,
        out_shape=jax.ShapeDtypeStruct((B, A, S, H), out_dtype),
        grid=(B, A // ta),
        in_specs=[pl.BlockSpec((1, S, H), lambda b, a: (b, 0, 0))],   # constant over a
        out_specs=pl.BlockSpec((1, ta, S, H), lambda b, a: (b, a, 0, 0)),
        compiler_params=pltpu.CompilerParams(
            dimension_semantics=("parallel", "parallel"),
            vmem_limit_bytes=int(max(bc_vmem + 4 * 2**20, 32 * 2**20)),
        ),
        cost_estimate=pl.CostEstimate(
            flops=0,
            transcendentals=0,
            bytes_accessed=B * S * H * out_dtype.itemsize
                           + B * A * S * H * out_dtype.itemsize),
    )(mixed)

    # Indicator channel == posterior rows (a bitwise copy): returned directly
    # instead of burning a redundant kernel read+write stream on it.
    indicator = posterior.astype(out_dtype)
    # TODO(synk): ragged amr_len / src_len (PackedSequence / DoublePackedSequence)
    # is represented by dense uniform-length tensors; padded positions hold
    # valid-looking data and must be masked downstream.
    return emb, indicator


# --------------------------------------------------------------------------
# Pure-JAX reference of the module's forward (ScalarMix + posteriorIndictedEmb).
# --------------------------------------------------------------------------
def _reference(layer_embs, posterior, mix_scalars, gamma):
    w = jax.nn.softmax(mix_scalars) * gamma
    mixed = jnp.einsum("l,lbsh->bsh", w, layer_embs.astype(jnp.float32))
    B, S, H = mixed.shape
    A = posterior.shape[1]
    expanded = jnp.broadcast_to(mixed[:, None, :, :], (B, A, S, H))
    return jnp.concatenate(
        [expanded, posterior[..., None].astype(jnp.float32)], axis=-1)


if __name__ == "__main__":
    # mix_size=3 BERT layers, batch=2, src_len=8, hidden=128 (kept a multiple
    # of 128 so emb stores are lane-dense, like real BERT 768/1024),
    # amr_len=16  ->  rel_src_enc_size = H + 1 = 129.
    L, B, S, H, A = 3, 2, 8, 128, 16

    key = jax.random.PRNGKey(0)
    k1, k2, k3 = jax.random.split(key, 3)

    # BERT per-layer activations (bf16, as recommended) and posterior
    # alignment distributions over source tokens for each AMR node.
    layer_embs = jax.random.normal(k1, (L, B, S, H), dtype=jnp.float32).astype(jnp.bfloat16)
    posterior = jax.nn.softmax(
        jax.random.normal(k2, (B, A, S), dtype=jnp.float32), axis=-1)
    # ScalarMix parameters (defaults zeros / 1.0, perturbed so the mix is non-trivial).
    mix_scalars = 0.1 * jax.random.normal(k3, (L,), dtype=jnp.float32)
    gamma = jnp.float32(1.0)

    emb, indicator = rel_bert_sentence_encoder(layer_embs, posterior,
                                               mix_scalars, gamma)
    emb, indicator = jax.block_until_ready((emb, indicator))

    # The module's output is cat([expanded_emb, indicator], 2); re-assemble the
    # lane-dense kernel outputs with one XLA concat for the semantic check.
    out = jnp.concatenate(
        [emb.astype(jnp.float32), indicator[..., None].astype(jnp.float32)],
        axis=-1)

    ref = _reference(layer_embs, posterior, mix_scalars, gamma)
    # bf16 outputs quantize the f32 reference -> loosened tolerance (expected).
    np.testing.assert_allclose(np.asarray(out), np.asarray(ref),
                               rtol=2e-2, atol=2e-2)
    assert out.shape == (B, A, S, H + 1)
    assert emb.dtype == jnp.bfloat16 and indicator.dtype == jnp.bfloat16

    print("KERNEL_OK")
</pallas_src>

<mosaic_0001>
module attributes {stable_mosaic.version = 11 : i64} {
  func.func @_scalar_mix_kernel(%arg0: i32, %arg1: i32, %arg2: memref<3xf32, #tpu.memory_space<smem>>, %arg3: memref<3x1x8x128xbf16, #tpu.memory_space<vmem>>, %arg4: memref<1x8x128xbf16, #tpu.memory_space<vmem>>) attributes {dimension_semantics = [#tpu.dimension_semantics<parallel>, #tpu.dimension_semantics<parallel>], iteration_bounds = array<i64: 2, 1>, scalar_prefetch = 0 : i64, scratch_operands = 0 : i64, tpu.core_type = #tpu.core_type<tc>, window_params = [{transform_indices = @transform_0, window_bounds = array<i64: 3>}, {transform_indices = @transform_1, window_bounds = array<i64: 3, 1, 8, 128>}, {transform_indices = @transform_2, window_bounds = array<i64: 1, 8, 128>}]} {
    %c0 = arith.constant 0 : index
    %0 = memref.load %arg2[%c0] : memref<3xf32, #tpu.memory_space<smem>>
    %c0_0 = arith.constant 0 : index
    %c0_1 = arith.constant 0 : index
    %c0_2 = arith.constant 0 : index
    %c0_3 = arith.constant 0 : index
    %1 = vector.load %arg3[%c0_0, %c0_1, %c0_2, %c0_3] : memref<3x1x8x128xbf16, #tpu.memory_space<vmem>>, vector<1x1x8x128xbf16>
    %2 = vector.shape_cast %1 : vector<1x1x8x128xbf16> to vector<8x128xbf16>
    %3 = arith.extf %2 : vector<8x128xbf16> to vector<8x128xf32>
    %4 = vector.broadcast %0 : f32 to vector<8x128xf32>
    %5 = arith.mulf %4, %3 : vector<8x128xf32>
    %c1 = arith.constant 1 : index
    %6 = memref.load %arg2[%c1] : memref<3xf32, #tpu.memory_space<smem>>
    %c1_4 = arith.constant 1 : index
    %c0_5 = arith.constant 0 : index
    %c0_6 = arith.constant 0 : index
    %c0_7 = arith.constant 0 : index
    %7 = vector.load %arg3[%c1_4, %c0_5, %c0_6, %c0_7] : memref<3x1x8x128xbf16, #tpu.memory_space<vmem>>, vector<1x1x8x128xbf16>
    %8 = vector.shape_cast %7 : vector<1x1x8x128xbf16> to vector<8x128xbf16>
    %9 = arith.extf %8 : vector<8x128xbf16> to vector<8x128xf32>
    %10 = vector.broadcast %6 : f32 to vector<8x128xf32>
    %11 = arith.mulf %10, %9 : vector<8x128xf32>
    %12 = arith.addf %5, %11 : vector<8x128xf32>
    %c2 = arith.constant 2 : index
    %13 = memref.load %arg2[%c2] : memref<3xf32, #tpu.memory_space<smem>>
    %c2_8 = arith.constant 2 : index
    %c0_9 = arith.constant 0 : index
    %c0_10 = arith.constant 0 : index
    %c0_11 = arith.constant 0 : index
    %14 = vector.load %arg3[%c2_8, %c0_9, %c0_10, %c0_11] : memref<3x1x8x128xbf16, #tpu.memory_space<vmem>>, vector<1x1x8x128xbf16>
    %15 = vector.shape_cast %14 : vector<1x1x8x128xbf16> to vector<8x128xbf16>
    %16 = arith.extf %15 : vector<8x128xbf16> to vector<8x128xf32>
    %17 = vector.broadcast %13 : f32 to vector<8x128xf32>
    %18 = arith.mulf %17, %16 : vector<8x128xf32>
    %19 = arith.addf %12, %18 : vector<8x128xf32>
    %20 = arith.truncf %19 : vector<8x128xf32> to vector<8x128xbf16>
    %c0_12 = arith.constant 0 : index
    %c0_13 = arith.constant 0 : index
    %c0_14 = arith.constant 0 : index
    %21 = vector.load %arg4[%c0_12, %c0_13, %c0_14] : memref<1x8x128xbf16, #tpu.memory_space<vmem>>, vector<1x8x128xbf16>
    %22 = vector.shape_cast %21 : vector<1x8x128xbf16> to vector<8x128xbf16>
    %23 = vector.shape_cast %20 : vector<8x128xbf16> to vector<1x8x128xbf16>
    tpu.vector_store %arg4[%c0_12, %c0_13, %c0_14], %23 {strides = array<i32>} : memref<1x8x128xbf16, #tpu.memory_space<vmem>>, vector<1x8x128xbf16>,
    return
  }
  func.func @transform_0(%arg0: i32, %arg1: i32) -> i32 {
    %c0_i32 = arith.constant 0 : i32
    %c0_i32_0 = arith.constant 0 : i32
    return %c0_i32 : i32
  }
  func.func @transform_1(%arg0: i32, %arg1: i32) -> (i32, i32, i32, i32) {
    %c0_i32 = arith.constant 0 : i32
    %c0_i32_0 = arith.constant 0 : i32
    %c0_i32_1 = arith.constant 0 : i32
    return %c0_i32, %arg0, %arg1, %c0_i32_0 : i32, i32, i32, i32
  }
  func.func @transform_2(%arg0: i32, %arg1: i32) -> (i32, i32, i32) {
    %c0_i32 = arith.constant 0 : i32
    %c0_i32_0 = arith.constant 0 : i32
    return %arg0, %arg1, %c0_i32 : i32, i32, i32
  }
}

</mosaic_0001>

<llo_original>
// kernel: tpu_custom_call.1
$region0: #{tpu_custom_call.1}
  #allocation0 [shape = 'u32[]', space=smem, size = 0x4, offset = 0x4, fixed_abs, tag = 'smem constant byte address 0x4 - core index']
  #allocation1 [shape = 'u32[144,128]{1,0:T(1,128)}', space=vmem, size = 0x12000, scoped, tag = 'internal scratch']
  %s0 = inlined_call_operand.hbm [shape: f32[3], index: 0, kind: input, shape index: {}]
  %s1 = inlined_call_operand.hbm [shape: bf16[3,2,8,128], index: 1, kind: input, shape index: {}]
  %s2 = inlined_call_operand.hbm [shape: bf16[2,8,128], index: 2, kind: output, shape index: {}]
  %s3 = sld [smem:[#allocation0]]
  $region49: #{tpu_custom_call.1} parent=0
    _
  %s5 = ssub.s32 1, %s3
  %s6 = scalar_select 0, %s5, %s3
  $region1: #{tpu_custom_call.1} parent=0
    #allocation2 [shape = 'u8[512]{0}', space=smem, size = 0x200, scoped, tag = 'input window, operand 0, single buffered']
    #allocation3 [shape = 's32[2]{0}', space=sflag, size = 0x8, scoped, tag = 'scoped memory for tpu_custom_call.1']
    #allocation4 [shape = 's32[2]{0}', space=sflag, size = 0x8, scoped, tag = 'scoped memory for tpu_custom_call.1']
    #allocation5 [shape = 's32[2]{0}', space=sflag, size = 0x8, scoped, tag = 'scoped memory for tpu_custom_call.1']
    #allocation6 [shape = 'u8[12288]{0}', space=vmem, size = 0x3000, scoped, tag = 'input window, operand 1']
    #allocation7 [shape = 'u8[4096]{0}', space=vmem, size = 0x1000, scoped, tag = 'output window, operand 0']
    %7 = vsyncpa [#allocation5], 0
    %8 = vsyncpa [#allocation3], 0
    %s9 = scalar_lea.sflag [#allocation3], 1
    %10 = vsyncpa %s9, 0
    %11 = vsyncpa [#allocation4], 0
    %s12 = scalar_lea.sflag [#allocation4], 1
    %13 = vsyncpa %s12, 0
    loop: start=0, step=1, limit=4
    $region2: #{tpu_custom_call.1} parent=1 // loop_pre_header
      _
    $region3: #{tpu_custom_call.1} parent=1 // loop_header
      %s15 = sphi 0, %s19
      %p16 = scmp.ge.s32.totalorder %s15, 4
      %s22 = sphi 0, %s34
      %s23 = sphi 0, %s30
      %s24 = sphi 0, %s22
      %s25 = sphi 0, %s23
      %s26 = sphi 0, %s24
      %s27 = sphi 0, %s25
      %s35 = sphi 0, %s35
      %s37 = sphi 0, %s35
      %s38 = sphi 0, %s37
      %s52 = sphi 0, %s38
      %s60 = sphi 0, %s62
      %s63 = sphi 0, %s60
      %s64 = sphi 0, %s63
      %s80 = sphi 0, %s64
      %s88 = sphi 0, %s90
      %s91 = sphi 0, %s88
      %s92 = sphi 0, %s91
      %s108 = sphi 0, %s92
    $region4: #{tpu_custom_call.1} parent=1 // loop_header_branch
      %18 = sbr.rel (%p16) target = $region8
    $region5: #{tpu_custom_call.1} parent=1 // loop_body
      %s20 = ssub.s32 %s15, 1
      %s21 = ssub.s32 %s15, 2
      %s28 = sadd.s32 1, %s23
      %p29 = scmp.ge.s32.totalorder %s28, 1
      %s30 = scalar_select %p29, 0, %s28
      %s31 = sadd.s32 1, %s22
      %s32 = scalar_select %p29, %s31, %s22
      %p33 = scmp.ge.s32.totalorder %s32, 2
      %s34 = scalar_select %p33, 0, %s32
      %s36 = sadd.s32 %s35, 1
      %p39 = scmp.eq.s32.totalorder %s15, 1
      %p40 = scmp.ne.s32.totalorder %s35, %s37
      %p41 = scmp.eq.s32.totalorder %s15, 0
      %p42 = por %p40, %p41
      %p43 = scmp.ne.s32.totalorder %s35, %s37
      %p44 = scmp.eq.s32.totalorder %s20, 1
      %p45 = por %p43, %p44
      %p46 = scmp.ne.s32.totalorder %s37, %s38
      %p47 = scmp.eq.s32.totalorder %s20, 0
      %p48 = por %p46, %p47
      %p49 = scmp.ne.s32.totalorder %s37, %s38
      %p50 = scmp.eq.s32.totalorder %s21, 1
      %p51 = por %p49, %p50
      %p53 = scmp.ne.s32.totalorder %s38, %s52
      %p54 = scmp.eq.s32.totalorder %s21, 0
      %p55 = por %p53, %p54
      %s56 = ssub.s32 %s22, %s34
      %s57 = ssub.s32 %s23, %s30
      %s58 = sor.u32 %s56, %s57
      %p59 = scmp.eq.s32.totalorder %s58, 0
      %s61 = sadd.s32 %s60, 1
      %s62 = scalar_select %p59, %s60, %s61
      %p65 = pneg %p59
      %p66 = scmp.eq.s32.totalorder %s15, 1
      %p67 = por %p65, %p66
      %p68 = scmp.ne.s32.totalorder %s60, %s63
      %p69 = scmp.eq.s32.totalorder %s15, 0
      %p70 = por %p68, %p69
      %p71 = scmp.ne.s32.totalorder %s60, %s63
      %p72 = scmp.eq.s32.totalorder %s20, 1
      %p73 = por %p71, %p72
      %p74 = scmp.ne.s32.totalorder %s63, %s64
      %p75 = scmp.eq.s32.totalorder %s20, 0
      %p76 = por %p74, %p75
      %p77 = scmp.ne.s32.totalorder %s63, %s64
      %p78 = scmp.eq.s32.totalorder %s21, 1
      %p79 = por %p77, %p78
      %p81 = scmp.ne.s32.totalorder %s64, %s80
      %p82 = scmp.eq.s32.totalorder %s21, 0
      %p83 = por %p81, %p82
      %s84 = ssub.s32 %s22, %s34
      %s85 = ssub.s32 %s23, %s30
      %s86 = sor.u32 %s84, %s85
      %p87 = scmp.eq.s32.totalorder %s86, 0
      %s89 = sadd.s32 %s88, 1
      %s90 = scalar_select %p87, %s88, %s89
      %p93 = pneg %p87
      %p94 = scmp.eq.s32.totalorder %s15, 1
      %p95 = por %p93, %p94
      %p96 = scmp.ne.s32.totalorder %s88, %s91
      %p97 = scmp.eq.s32.totalorder %s15, 0
      %p98 = por %p96, %p97
      %p99 = scmp.ne.s32.totalorder %s88, %s91
      %p100 = scmp.eq.s32.totalorder %s20, 1
      %p101 = por %p99, %p100
      %p102 = scmp.ne.s32.totalorder %s91, %s92
      %p103 = scmp.eq.s32.totalorder %s20, 0
      %p104 = por %p102, %p103
      %p105 = scmp.ne.s32.totalorder %s91, %s92
      %p106 = scmp.eq.s32.totalorder %s21, 1
      %p107 = por %p105, %p106
      %p109 = scmp.ne.s32.totalorder %s92, %s108
      %p110 = scmp.eq.s32.totalorder %s21, 0
      %p111 = por %p109, %p110
      %p112 = scmp.le.s32.totalorder 1, %s15
      %p113 = scmp.lt.s32.totalorder %s15, 3
      %p114 = pnand %p112, %p113
      %p115 = pneg %p114
      // Predicated region
      $region9: #{tpu_custom_call.1} parent=5 // pred_check
        _
      $region10: #{tpu_custom_call.1} parent=5 // pred_check_branch
        %117 = sbr.rel (%p114) target = $region12
      $region11: #{tpu_custom_call.1} parent=5 // pred_region
        %s118 = ssub.s32 %s15, 1
        // Predicated region
        $region13: #{tpu_custom_call.1} parent=11 // pred_check
          %p119 = pneg %p48
        $region14: #{tpu_custom_call.1} parent=11 // pred_check_branch
          %121 = sbr.rel (%p119) target = $region16
        $region15: #{tpu_custom_call.1} parent=11 // pred_region
          %s123 = ssub.s32 16, 16
          %124 = vsyncadd [#allocation5], %s123
          %127 = dma.hbm_to_smem %s0, 16, [#allocation2], [#allocation5]
        $region16: #{tpu_custom_call.1} parent=11 // pred_fallthru
          _
      $region12: #{tpu_custom_call.1} parent=5 // pred_fallthru
        _
      %p128 = scmp.lt.s32.totalorder %s15, 2
      // Predicated region
      $region17: #{tpu_custom_call.1} parent=5 // pred_check
        %p129 = pneg %p128
      $region18: #{tpu_custom_call.1} parent=5 // pred_check_branch
        %131 = sbr.rel (%p129) target = $region20
      $region19: #{tpu_custom_call.1} parent=5 // pred_region
        // Predicated region
        $region21: #{tpu_custom_call.1} parent=19 // pred_check
          %p132 = pneg %p70
        $region22: #{tpu_custom_call.1} parent=19 // pred_check_branch
          %134 = sbr.rel (%p132) target = $region24
        $region23: #{tpu_custom_call.1} parent=19 // pred_region
          %s135 = sand.u32 %s60, 1
          %s136 = scalar_lea.sflag [#allocation3], %s135
          %s137 = sand.u32 %s60, 1
          %s138 = smul.addr %s137, 12
          %s139 = scalar_lea.vmem [#allocation6], %s138
          %s141 = ssub.s32 192, 192
          %142 = vsyncadd %s136, %s141
          %s143 = sadd.s32 %s23, %s22
          %s144 = smul.addr %s143, 64
          %s145 = scalar_lea.hbm %s1, %s144
          %s146 = sshll.u32 %s139, 4
          %s147 = int_to_ptr.vmem [resolvable:$true] %s146
          %152 = dma.hbm_to_vmem [thread:$0]  %s145, 192, %s147, %s136, 128, 64, 4
        $region24: #{tpu_custom_call.1} parent=19 // pred_fallthru
          _
      $region20: #{tpu_custom_call.1} parent=5 // pred_fallthru
        _
      %p153 = scmp.le.s32.totalorder 1, %s15
      %p154 = scmp.lt.s32.totalorder %s15, 3
      %p155 = pnand %p153, %p154
      %p156 = pneg %p155
      // Predicated region
      $region25: #{tpu_custom_call.1} parent=5 // pred_check
        _
      $region26: #{tpu_custom_call.1} parent=5 // pred_check_branch
        %158 = sbr.rel (%p155) target = $region28
      $region27: #{tpu_custom_call.1} parent=5 // pred_region
        %s159 = ssub.s32 %s15, 1
        // Predicated region
        $region29: #{tpu_custom_call.1} parent=27 // pred_check
          %p160 = pneg %p48
        $region30: #{tpu_custom_call.1} parent=27 // pred_check_branch
          %162 = sbr.rel (%p160) target = $region32
        $region31: #{tpu_custom_call.1} parent=27 // pred_region
          %163 = dma.done [#allocation5], 16
        $region32: #{tpu_custom_call.1} parent=27 // pred_fallthru
          _
        %s164 = sand.u32 %s63, 1
        %s165 = scalar_lea.sflag [#allocation3], %s164
        %s166 = sand.u32 %s63, 1
        %s167 = smul.addr %s166, 12
        %s168 = scalar_lea.vmem [#allocation6], %s167
        // Predicated region
        $region33: #{tpu_custom_call.1} parent=27 // pred_check
          %p169 = pneg %p76
        $region34: #{tpu_custom_call.1} parent=27 // pred_check_branch
          %171 = sbr.rel (%p169) target = $region36
        $region35: #{tpu_custom_call.1} parent=27 // pred_region
          %172 = dma.done %s165, 192
        $region36: #{tpu_custom_call.1} parent=27 // pred_fallthru
          _
        %173 = sfence
        %p174 = pneg %p48
        %p175 = pneg %p45
        %s176 = sand.u32 %s63, 1
        %s177 = scalar_lea.sflag [#allocation3], %s176
        %s178 = sand.u32 %s63, 1
        %s179 = smul.addr %s178, 12
        %s180 = scalar_lea.vmem [#allocation6], %s179
        %p181 = pneg %p76
        %p182 = pneg %p73
        %p183 = pneg %p104
        %p184 = pneg %p101
        %s185 = sand.u32 %s91, 1
        %s186 = scalar_lea.sflag [#allocation4], %s185
        %s187 = sand.u32 %s91, 1
        %s188 = smul.addr %s187, 4
        %s189 = scalar_lea.vmem [#allocation7], %s188
        %s190 = sld [smem:[#allocation2]]
        %v191 = vld [vmem:[%s168] sm:$0xf]
        %v192 = vunpack.c.l.bf16 %v191
        %v193 = vstv %s190
        %v194 = vmul.f32 %v193, %v192
        %s195 = sld [smem:[#allocation2 + $0x1]]
        %s196 = scalar_lea.vmem %s168, 4 [#allocation6]
        %v197 = vld [vmem:[%s196] sm:$0xf]
        %v198 = vunpack.c.l.bf16 %v197
        %v199 = vstv %s195
        %v200 = vmul.f32 %v199, %v198
        %v201 = vadd.f32 %v194, %v200
        %s202 = sld [smem:[#allocation2 + $0x2]]
        %s203 = scalar_lea.vmem %s168, 8 [#allocation6]
        %v204 = vld [vmem:[%s203] sm:$0xf]
        %v205 = vunpack.c.l.bf16 %v204
        %v206 = vstv %s202
        %v207 = vmul.f32 %v206, %v205
        %v208 = vadd.f32 %v201, %v207
        %v209 = vpack.c.bf16 %v208, %v208
        %210 = vst [vmem:[%s189] sm:$0xf] %v209
        %s211 = sand.u32 %s91, 1
        %s212 = scalar_lea.sflag [#allocation4], %s211
        %s213 = sand.u32 %s91, 1
        %s214 = smul.addr %s213, 4
        %s215 = scalar_lea.vmem [#allocation7], %s214
        // Predicated region
        $region37: #{tpu_custom_call.1} parent=27 // pred_check
          %p216 = pneg %p101
        $region38: #{tpu_custom_call.1} parent=27 // pred_check_branch
          %218 = sbr.rel (%p216) target = $region40
        $region39: #{tpu_custom_call.1} parent=27 // pred_region
          %s220 = ssub.s32 64, 64
          %221 = vsyncadd %s212, %s220
          %s222 = sadd.s32 %s25, %s24
          %s223 = smul.addr %s222, 64
          %s224 = scalar_lea.hbm %s2, %s223
          %s226 = sshll.u32 %s215, 4
          %s227 = int_to_ptr.vmem [resolvable:$true] %s226
          %229 = dma.vmem_to_hbm [thread:$0]  %s227, 64, %s224, %s212
        $region40: #{tpu_custom_call.1} parent=27 // pred_fallthru
          _
      $region28: #{tpu_custom_call.1} parent=5 // pred_fallthru
        _
      %p230 = scmp.le.s32.totalorder 2, %s15
      // Predicated region
      $region41: #{tpu_custom_call.1} parent=5 // pred_check
        %p231 = pneg %p230
      $region42: #{tpu_custom_call.1} parent=5 // pred_check_branch
        %233 = sbr.rel (%p231) target = $region44
      $region43: #{tpu_custom_call.1} parent=5 // pred_region
        %s234 = ssub.s32 %s15, 2
        // Predicated region
        $region45: #{tpu_custom_call.1} parent=43 // pred_check
          %p235 = pneg %p107
        $region46: #{tpu_custom_call.1} parent=43 // pred_check_branch
          %237 = sbr.rel (%p235) target = $region48
        $region47: #{tpu_custom_call.1} parent=43 // pred_region
          %s238 = sand.u32 %s92, 1
          %s239 = scalar_lea.sflag [#allocation4], %s238
          %s240 = sand.u32 %s92, 1
          %s241 = smul.addr %s240, 4
          %s242 = scalar_lea.vmem [#allocation7], %s241
          %243 = dma.done %s239, 64
        $region48: #{tpu_custom_call.1} parent=43 // pred_fallthru
          _
      $region44: #{tpu_custom_call.1} parent=5 // pred_fallthru
        _
    $region6: #{tpu_custom_call.1} parent=1 // loop_footer
      %s19 = sadd.s32 1, %s15
    $region7: #{tpu_custom_call.1} parent=1 // loop_footer_branch
      %14 = sbr.rel target = $region3
    $region8: #{tpu_custom_call.1} parent=1 // loop_exit
      _
    %244 = vsyncpa [#allocation3], 1
    %s245 = scalar_lea.sflag [#allocation3], 1
    %246 = vsyncpa %s245, 1
    %247 = vsyncpa [#allocation4], 1
    %s248 = scalar_lea.sflag [#allocation4], 1
    %249 = vsyncpa %s248, 1
    %250 = vsyncpa [#allocation5], 1
    %s251 = scalar_lea.sflag [#allocation5], 1
    %252 = vsyncpa %s251, 1

</llo_original>
